<compile_context>
chip_gen: v7x
topology: tpu7x:2x2x1
jax: 0.10.0
libtpu: 0.0.40
codegen_flags: <defaults>
</compile_context>

<pallas_src>
import jax
import jax.numpy as jnp
from jax.experimental import pallas as pl
from jax.experimental.pallas import tpu as pltpu

IN_FEATURES = 224
HIDDEN = 24


def _round_up(n, m):
    return ((n + m - 1) // m) * m


def mlp_kernel(x_ref, w1_ref, b1_ref, w2_ref, b2_ref, w3_ref, b3_ref, o_ref):
    # x tile: [TILE_B, 224] f32 streamed by the grid; bf16 cast on the VPU
    # (kernel is MXU-bound, so the f32 DMA and the cast ride existing slack).
    x = x_ref[...].astype(jnp.bfloat16)

    # Linear(224 -> 24) + ReLU   (bf16 MXU inputs, f32 accumulate + f32 epilogue)
    h1 = jnp.dot(x, w1_ref[...], preferred_element_type=jnp.float32) + b1_ref[...]
    h1 = jnp.maximum(h1, 0.0)

    # Linear(24 -> 224) + ReLU
    h2 = jnp.dot(h1.astype(jnp.bfloat16), w2_ref[...],
                 preferred_element_type=jnp.float32) + b2_ref[...]
    h2 = jnp.maximum(h2, 0.0)

    # Linear(224 -> 1): N=1, so keep it off the MXU.  VPU multiply against the
    # (1, 224) weight row + XLU cross-lane reduce, all in f32.
    logits = jnp.sum(h2 * w3_ref[...], axis=-1, keepdims=True) + b3_ref[...]  # [TILE_B, 1]

    # Exact sigmoid via a single EUP tanh:  sigmoid(z) = 0.5 * (tanh(z/2) + 1)
    o_ref[...] = 0.5 * (jnp.tanh(0.5 * logits) + 1.0)


def neural_network_forward(x, params, *, max_tile_b=4096):
    """x: any shape [B, ...] with prod(...) == 224.  Returns [B, 1] float32."""
    B = x.shape[0]
    x_flat = x.reshape(B, -1)                      # nn.Flatten()
    assert x_flat.shape[1] == IN_FEATURES, "model expects 224 input features"

    w1, b1, w2, b2, w3, b3 = params

    # Only the tiny weights get a host-side bf16 cast; x stays f32 (no extra
    # wrapper HBM pass, no pad).  Layer-3 weight becomes a f32 (1, 224) row.
    w1b = w1.astype(jnp.bfloat16)
    w2b = w2.astype(jnp.bfloat16)
    w3_row = w3.reshape(1, IN_FEATURES).astype(jnp.float32)

    # Batch tile: large (<= 4096 rows) to amortize per-step overhead and MXU
    # RHS reloads; split in half so grid >= 2 for big batches (v7x megacore);
    # never larger than the 8-aligned batch (small-batch path, no waste).
    tile_b = min(max_tile_b,
                 _round_up(pl.cdiv(B, 2), 128),
                 _round_up(B, 8))
    grid = (pl.cdiv(B, tile_b),)                   # ragged tail -> edge-block masking
    resident = lambda i: (0, 0)                    # weights/biases stay in VMEM

    flops = 2 * B * (IN_FEATURES * HIDDEN + HIDDEN * IN_FEATURES + IN_FEATURES)
    bytes_accessed = (
        B * IN_FEATURES * 4                              # x (f32)
        + B * 4                                          # output (f32)
        + 2 * (2 * IN_FEATURES * HIDDEN)                 # w1, w2 (bf16)
        + 4 * IN_FEATURES                                # w3 row (f32)
        + 4 * (HIDDEN + IN_FEATURES + 1)                 # biases (f32)
    )

    return pl.pallas_call(
        mlp_kernel,
        out_shape=jax.ShapeDtypeStruct((B, 1), jnp.float32),
        grid=grid,
        in_specs=[
            pl.BlockSpec((tile_b, IN_FEATURES), lambda i: (i, 0)),  # x: streamed per tile
            pl.BlockSpec(w1b.shape, resident),
            pl.BlockSpec(b1.shape, resident),
            pl.BlockSpec(w2b.shape, resident),
            pl.BlockSpec(b2.shape, resident),
            pl.BlockSpec(w3_row.shape, resident),
            pl.BlockSpec(b3.shape, resident),
        ],
        out_specs=pl.BlockSpec((tile_b, 1), lambda i: (i, 0)),
        compiler_params=pltpu.CompilerParams(
            dimension_semantics=("parallel",),   # batch tiles shard across TCs on v7x
        ),
        cost_estimate=pl.CostEstimate(
            flops=flops, transcendentals=B, bytes_accessed=bytes_accessed),
    )(x_flat, w1b, b1, w2b, b2, w3_row, b3)


def init_params(key):
    """Deterministic init matching PyTorch nn.Linear default (U[-1/sqrt(fan_in), +]).
    Weights stored as [in_features, out_features]; all params kept in f32."""
    def linear(key, fan_in, fan_out):
        kw, kb = jax.random.split(key)
        bound = 1.0 / jnp.sqrt(fan_in)
        w = jax.random.uniform(kw, (fan_in, fan_out), jnp.float32, -bound, bound)
        b = jax.random.uniform(kb, (1, fan_out), jnp.float32, -bound, bound)
        return w, b

    k1, k2, k3 = jax.random.split(key, 3)
    w1, b1 = linear(k1, IN_FEATURES, HIDDEN)
    w2, b2 = linear(k2, HIDDEN, IN_FEATURES)
    w3, b3 = linear(k3, IN_FEATURES, 1)
    return (w1, b1, w2, b2, w3, b3)


if __name__ == "__main__":
    key = jax.random.PRNGKey(0)
    k_params, k_x = jax.random.split(key)

    params = init_params(k_params)

    # Input: batch=8, 4 "channels" x 56 features -> flattens to 224 per sample.
    x = jax.random.normal(k_x, (8, 4, 56), dtype=jnp.float32)

    out = jax.block_until_ready(neural_network_forward(x, params))
    assert out.shape == (8, 1)

    w1, b1, w2, b2, w3, b3 = params
    xf = x.reshape(x.shape[0], -1)

    # Reference 1: same mixed-precision math as the kernel
    # (bf16 MXU for layers 1-2, f32 accumulate, f32 layer 3, exact sigmoid).
    bf = jnp.bfloat16
    h1 = jnp.maximum(jnp.dot(xf.astype(bf), w1.astype(bf),
                             preferred_element_type=jnp.float32) + b1, 0.0)
    h2 = jnp.maximum(jnp.dot(h1.astype(bf), w2.astype(bf),
                             preferred_element_type=jnp.float32) + b2, 0.0)
    ref_mixed = jax.nn.sigmoid(h2 @ w3 + b3)
    assert jnp.allclose(out, ref_mixed, atol=1e-3), "mismatch vs mixed-precision reference"

    # Reference 2: full-f32 reference of the original module (loose check: bf16 matmuls).
    ref_f32 = jax.nn.sigmoid(
        jnp.maximum(jnp.maximum(xf @ w1 + b1, 0.0) @ w2 + b2, 0.0) @ w3 + b3)
    assert jnp.allclose(out, ref_f32, atol=3e-2), "mismatch vs f32 reference"

    print("KERNEL_OK")
</pallas_src>

<mosaic_0001>
module attributes {stable_mosaic.version = 11 : i64} {
  func.func @mlp_kernel(%arg0: i32, %arg1: memref<8x224xf32, #tpu.memory_space<vmem>>, %arg2: memref<224x24xbf16, #tpu.memory_space<vmem>>, %arg3: memref<1x24xf32, #tpu.memory_space<vmem>>, %arg4: memref<24x224xbf16, #tpu.memory_space<vmem>>, %arg5: memref<1x224xf32, #tpu.memory_space<vmem>>, %arg6: memref<1x224xf32, #tpu.memory_space<vmem>>, %arg7: memref<1x1xf32, #tpu.memory_space<vmem>>, %arg8: memref<8x1xf32, #tpu.memory_space<vmem>>) attributes {dimension_semantics = [#tpu.dimension_semantics<parallel>], iteration_bounds = array<i64: 1>, scalar_prefetch = 0 : i64, scratch_operands = 0 : i64, tpu.core_type = #tpu.core_type<tc>, window_params = [{transform_indices = @transform_0, window_bounds = array<i64: 8, 224>}, {pipeline_mode = #tpu.pipeline_mode<synchronous>, transform_indices = @transform_1, window_bounds = array<i64: 224, 24>}, {pipeline_mode = #tpu.pipeline_mode<synchronous>, transform_indices = @transform_2, window_bounds = array<i64: 1, 24>}, {pipeline_mode = #tpu.pipeline_mode<synchronous>, transform_indices = @transform_3, window_bounds = array<i64: 24, 224>}, {pipeline_mode = #tpu.pipeline_mode<synchronous>, transform_indices = @transform_4, window_bounds = array<i64: 1, 224>}, {pipeline_mode = #tpu.pipeline_mode<synchronous>, transform_indices = @transform_5, window_bounds = array<i64: 1, 224>}, {pipeline_mode = #tpu.pipeline_mode<synchronous>, transform_indices = @transform_6, window_bounds = array<i64: 1, 1>}, {transform_indices = @transform_7, window_bounds = array<i64: 8, 1>}]} {
    %c0 = arith.constant 0 : index
    %c0_0 = arith.constant 0 : index
    %0 = vector.load %arg1[%c0, %c0_0] : memref<8x224xf32, #tpu.memory_space<vmem>>, vector<8x224xf32>
    %1 = arith.truncf %0 : vector<8x224xf32> to vector<8x224xbf16>
    %c0_1 = arith.constant 0 : index
    %c0_2 = arith.constant 0 : index
    %2 = vector.load %arg2[%c0_1, %c0_2] : memref<224x24xbf16, #tpu.memory_space<vmem>>, vector<224x24xbf16>
    %cst = arith.constant dense<0.000000e+00> : vector<8x24xf32>
    %3 = tpu.matmul %1, %2, %cst {dimension_numbers = #tpu.dot_dimension_numbers<[1], [0], [0], [1], [0, 0, 1, 1], [], []>} : vector<8x224xbf16>, vector<224x24xbf16>, vector<8x24xf32> -> vector<8x24xf32>
    %c0_3 = arith.constant 0 : index
    %c0_4 = arith.constant 0 : index
    %4 = vector.load %arg3[%c0_3, %c0_4] : memref<1x24xf32, #tpu.memory_space<vmem>>, vector<1x24xf32>
    %5 = vector.broadcast %4 : vector<1x24xf32> to vector<8x24xf32>
    %6 = arith.addf %3, %5 : vector<8x24xf32>
    %cst_5 = arith.constant 0.000000e+00 : f32
    %7 = vector.broadcast %cst_5 : f32 to vector<8x24xf32>
    %8 = arith.maximumf %6, %7 : vector<8x24xf32>
    %9 = arith.truncf %8 : vector<8x24xf32> to vector<8x24xbf16>
    %c0_6 = arith.constant 0 : index
    %c0_7 = arith.constant 0 : index
    %10 = vector.load %arg4[%c0_6, %c0_7] : memref<24x224xbf16, #tpu.memory_space<vmem>>, vector<24x224xbf16>
    %cst_8 = arith.constant dense<0.000000e+00> : vector<8x224xf32>
    %11 = tpu.matmul %9, %10, %cst_8 {dimension_numbers = #tpu.dot_dimension_numbers<[1], [0], [0], [1], [0, 0, 1, 1], [], []>} : vector<8x24xbf16>, vector<24x224xbf16>, vector<8x224xf32> -> vector<8x224xf32>
    %c0_9 = arith.constant 0 : index
    %c0_10 = arith.constant 0 : index
    %12 = vector.load %arg5[%c0_9, %c0_10] : memref<1x224xf32, #tpu.memory_space<vmem>>, vector<1x224xf32>
    %13 = vector.broadcast %12 : vector<1x224xf32> to vector<8x224xf32>
    %14 = arith.addf %11, %13 : vector<8x224xf32>
    %cst_11 = arith.constant 0.000000e+00 : f32
    %15 = vector.broadcast %cst_11 : f32 to vector<8x224xf32>
    %16 = arith.maximumf %14, %15 : vector<8x224xf32>
    %c0_12 = arith.constant 0 : index
    %c0_13 = arith.constant 0 : index
    %17 = vector.load %arg6[%c0_12, %c0_13] : memref<1x224xf32, #tpu.memory_space<vmem>>, vector<1x224xf32>
    %18 = vector.broadcast %17 : vector<1x224xf32> to vector<8x224xf32>
    %19 = arith.mulf %16, %18 : vector<8x224xf32>
    %cst_14 = arith.constant dense<0.000000e+00> : vector<8xf32>
    %20 = vector.multi_reduction <add>, %19, %cst_14 [1] : vector<8x224xf32> to vector<8xf32>
    %21 = vector.shape_cast %20 : vector<8xf32> to vector<8x1xf32>
    %c0_15 = arith.constant 0 : index
    %c0_16 = arith.constant 0 : index
    %22 = vector.load %arg7[%c0_15, %c0_16] : memref<1x1xf32, #tpu.memory_space<vmem>>, vector<1x1xf32>
    %23 = vector.broadcast %22 : vector<1x1xf32> to vector<8x1xf32>
    %24 = arith.addf %21, %23 : vector<8x1xf32>
    %cst_17 = arith.constant 5.000000e-01 : f32
    %25 = vector.broadcast %cst_17 : f32 to vector<8x1xf32>
    %26 = arith.mulf %25, %24 : vector<8x1xf32>
    %27 = math.tanh %26 : vector<8x1xf32>
    %cst_18 = arith.constant 1.000000e+00 : f32
    %28 = vector.broadcast %cst_18 : f32 to vector<8x1xf32>
    %29 = arith.addf %27, %28 : vector<8x1xf32>
    %cst_19 = arith.constant 5.000000e-01 : f32
    %30 = vector.broadcast %cst_19 : f32 to vector<8x1xf32>
    %31 = arith.mulf %30, %29 : vector<8x1xf32>
    %c0_20 = arith.constant 0 : index
    %c0_21 = arith.constant 0 : index
    %32 = vector.load %arg8[%c0_20, %c0_21] : memref<8x1xf32, #tpu.memory_space<vmem>>, vector<8x1xf32>
    tpu.vector_store %arg8[%c0_20, %c0_21], %31 {strides = array<i32>} : memref<8x1xf32, #tpu.memory_space<vmem>>, vector<8x1xf32>,
    return
  }
  func.func @transform_0(%arg0: i32) -> (i32, i32) {
    %c0_i32 = arith.constant 0 : i32
    %c0_i32_0 = arith.constant 0 : i32
    return %arg0, %c0_i32 : i32, i32
  }
  func.func @transform_1(%arg0: i32) -> (i32, i32) {
    %c0_i32 = arith.constant 0 : i32
    %c0_i32_0 = arith.constant 0 : i32
    %c0_i32_1 = arith.constant 0 : i32
    return %c0_i32, %c0_i32_0 : i32, i32
  }
  func.func @transform_2(%arg0: i32) -> (i32, i32) {
    %c0_i32 = arith.constant 0 : i32
    %c0_i32_0 = arith.constant 0 : i32
    %c0_i32_1 = arith.constant 0 : i32
    return %c0_i32, %c0_i32_0 : i32, i32
  }
  func.func @transform_3(%arg0: i32) -> (i32, i32) {
    %c0_i32 = arith.constant 0 : i32
    %c0_i32_0 = arith.constant 0 : i32
    %c0_i32_1 = arith.constant 0 : i32
    return %c0_i32, %c0_i32_0 : i32, i32
  }
  func.func @transform_4(%arg0: i32) -> (i32, i32) {
    %c0_i32 = arith.constant 0 : i32
    %c0_i32_0 = arith.constant 0 : i32
    %c0_i32_1 = arith.constant 0 : i32
    return %c0_i32, %c0_i32_0 : i32, i32
  }
  func.func @transform_5(%arg0: i32) -> (i32, i32) {
    %c0_i32 = arith.constant 0 : i32
    %c0_i32_0 = arith.constant 0 : i32
    %c0_i32_1 = arith.constant 0 : i32
    return %c0_i32, %c0_i32_0 : i32, i32
  }
  func.func @transform_6(%arg0: i32) -> (i32, i32) {
    %c0_i32 = arith.constant 0 : i32
    %c0_i32_0 = arith.constant 0 : i32
    %c0_i32_1 = arith.constant 0 : i32
    return %c0_i32, %c0_i32_0 : i32, i32
  }
  func.func @transform_7(%arg0: i32) -> (i32, i32) {
    %c0_i32 = arith.constant 0 : i32
    %c0_i32_0 = arith.constant 0 : i32
    return %arg0, %c0_i32 : i32, i32
  }
}

</mosaic_0001>

<llo_original>
// kernel: tpu_custom_call.1
$region0: #{tpu_custom_call.1}
  #allocation0 [shape = 'u32[]', space=smem, size = 0x4, offset = 0x4, fixed_abs, tag = 'smem constant byte address 0x4 - core index']
  #allocation1 [shape = 'u32[144,128]{1,0:T(1,128)}', space=vmem, size = 0x12000, scoped, tag = 'internal scratch']
  #allocation2 [shape = 'f32[1,1]{1,0:T(1,128)S(1)}', space=vmem, size = 0x200, scoped, tag = 'scoped memory for tpu_custom_call.1']
  %s0 = inlined_call_operand.vmem [shape: f32[8,224], index: 0, kind: input, shape index: {}]
  %s1 = inlined_call_operand.vmem [shape: bf16[224,24], index: 1, kind: input, shape index: {}]
  %s2 = inlined_call_operand.vmem [shape: f32[1,24], index: 2, kind: input, shape index: {}]
  %s3 = inlined_call_operand.vmem [shape: bf16[24,224], index: 3, kind: input, shape index: {}]
  %s4 = inlined_call_operand.vmem [shape: f32[1,224], index: 4, kind: input, shape index: {}]
  %s5 = inlined_call_operand.vmem [shape: f32[1,224], index: 5, kind: input, shape index: {}]
  %s6 = inlined_call_operand.<no memory space> [shape: f32[1,1], index: 6, kind: input, shape index: {}]
  %s7 = inlined_call_operand.vmem [shape: f32[8,1], index: 7, kind: output, shape index: {}]
  %s8 = sld [smem:[#allocation0]]
  $region38: #{tpu_custom_call.1} parent=0
    _
  %s10 = ssub.s32 1, %s8
  %s11 = scalar_select 0, %s10, %s8
  %v12 = vstv %s6
  %13 = vst [vmem:[#allocation2] sm:$0x1] %v12
  // Predicated region
  $region2: #{tpu_custom_call.1} parent=0 // pred_check
    _
  $region3: #{tpu_custom_call.1} parent=0 // pred_check_branch
    %15 = sbr.rel (0) target = $region5
  $region4: #{tpu_custom_call.1} parent=0 // pred_region
    _
  $region5: #{tpu_custom_call.1} parent=0 // pred_fallthru
    _
  // Predicated region
  $region6: #{tpu_custom_call.1} parent=0 // pred_check
    _
  $region7: #{tpu_custom_call.1} parent=0 // pred_check_branch
    %17 = sbr.rel (0) target = $region9
  $region8: #{tpu_custom_call.1} parent=0 // pred_region
    _
  $region9: #{tpu_custom_call.1} parent=0 // pred_fallthru
    _
  // Predicated region
  $region10: #{tpu_custom_call.1} parent=0 // pred_check
    _
  $region11: #{tpu_custom_call.1} parent=0 // pred_check_branch
    %19 = sbr.rel (0) target = $region13
  $region12: #{tpu_custom_call.1} parent=0 // pred_region
    _
  $region13: #{tpu_custom_call.1} parent=0 // pred_fallthru
    _
  // Predicated region
  $region14: #{tpu_custom_call.1} parent=0 // pred_check
    _
  $region15: #{tpu_custom_call.1} parent=0 // pred_check_branch
    %21 = sbr.rel (0) target = $region17
  $region16: #{tpu_custom_call.1} parent=0 // pred_region
    _
  $region17: #{tpu_custom_call.1} parent=0 // pred_fallthru
    _
  // Predicated region
  $region18: #{tpu_custom_call.1} parent=0 // pred_check
    _
  $region19: #{tpu_custom_call.1} parent=0 // pred_check_branch
    %23 = sbr.rel (0) target = $region21
  $region20: #{tpu_custom_call.1} parent=0 // pred_region
    _
  $region21: #{tpu_custom_call.1} parent=0 // pred_fallthru
    _
  // Predicated region
  $region22: #{tpu_custom_call.1} parent=0 // pred_check
    _
  $region23: #{tpu_custom_call.1} parent=0 // pred_check_branch
    %25 = sbr.rel (0) target = $region25
  $region24: #{tpu_custom_call.1} parent=0 // pred_region
    _
  $region25: #{tpu_custom_call.1} parent=0 // pred_fallthru
    _
  // Predicated region
  $region26: #{tpu_custom_call.1} parent=0 // pred_check
    _
  $region27: #{tpu_custom_call.1} parent=0 // pred_check_branch
    %27 = sbr.rel (0) target = $region29
  $region28: #{tpu_custom_call.1} parent=0 // pred_region
    _
  $region29: #{tpu_custom_call.1} parent=0 // pred_fallthru
    _
  %v29 = vld [vmem:[%s0] sm:$0xff]
  %v30 = vld [vmem:[%s0 + $0x8] sm:$0xff]
  %v31 = vpack.c.bf16 %v29, %v29
  %v32 = vpack.c.bf16 %v30, %v30
  %v33 = vld [vmem:[%s1] sm:$0xf]
  %v34 = vld [vmem:[%s1 + $0x4] sm:$0xf]
  %v35 = vld [vmem:[%s1 + $0x8] sm:$0xf]
  %v36 = vld [vmem:[%s1 + $0xc] sm:$0xf]
  %v37 = vld [vmem:[%s1 + $0x10] sm:$0xf]
  %v38 = vld [vmem:[%s1 + $0x14] sm:$0xf]
  %v39 = vld [vmem:[%s1 + $0x18] sm:$0xf]
  %v40 = vld [vmem:[%s1 + $0x1c] sm:$0xf]
  %v41 = vld [vmem:[%s1 + $0x20] sm:$0xf]
  %v42 = vld [vmem:[%s1 + $0x24] sm:$0xf]
  %v43 = vld [vmem:[%s1 + $0x28] sm:$0xf]
  %v44 = vld [vmem:[%s1 + $0x2c] sm:$0xf]
  %v45 = vld [vmem:[%s1 + $0x30] sm:$0xf]
  %v46 = vld [vmem:[%s1 + $0x34] sm:$0xf]
  %v47 = vld [vmem:[%s1 + $0x38] sm:$0xf]
  %v48 = vld [vmem:[%s1 + $0x3c] sm:$0xf]
  %v49 = vld [vmem:[%s1 + $0x40] sm:$0xf]
  %v50 = vld [vmem:[%s1 + $0x44] sm:$0xf]
  %v51 = vld [vmem:[%s1 + $0x48] sm:$0xf]
  %v52 = vld [vmem:[%s1 + $0x4c] sm:$0xf]
  %v53 = vld [vmem:[%s1 + $0x50] sm:$0xf]
  %v54 = vld [vmem:[%s1 + $0x54] sm:$0xf]
  %v55 = vld [vmem:[%s1 + $0x58] sm:$0xf]
  %v56 = vld [vmem:[%s1 + $0x5c] sm:$0xf]
  %v57 = vld [vmem:[%s1 + $0x60] sm:$0xf]
  %v58 = vld [vmem:[%s1 + $0x64] sm:$0xf]
  %v59 = vld [vmem:[%s1 + $0x68] sm:$0xf]
  %v60 = vld [vmem:[%s1 + $0x6c] sm:$0xf]
  %v61 = vld [vmem:[%s2] sm:$0x1]
  %v63 = vlaneseq
  %v64 = vshrl.u32 %v63, 7
  %v65 = vsub.s32 0, %v64
  %v66 = vrot.slane %v61, %v65
  %v96 = vunpack.c.l.b16 %v33
  %v97 = vunpack.c.l.b16 %v34
  %v98 = vunpack.c.l.b16 %v35
  %v99 = vunpack.c.l.b16 %v36
  %v100 = vunpack.c.l.b16 %v37
  %v101 = vunpack.c.l.b16 %v38
  %v102 = vunpack.c.l.b16 %v39
  %v103 = vunpack.c.l.b16 %v40
  %v104 = vunpack.c.l.b16 %v41
  %v105 = vunpack.c.l.b16 %v42
  %v106 = vunpack.c.l.b16 %v43
  %v107 = vunpack.c.l.b16 %v44
  %v108 = vunpack.c.l.b16 %v45
  %v109 = vunpack.c.l.b16 %v46
  %v110 = vunpack.c.l.b16 %v47
  %v111 = vunpack.c.l.b16 %v48
  %v112 = vunpack.c.l.b16 %v49
  %v113 = vunpack.c.l.b16 %v50
  %v114 = vunpack.c.l.b16 %v51
  %v115 = vunpack.c.l.b16 %v52
  %v116 = vunpack.c.l.b16 %v53
  %v117 = vunpack.c.l.b16 %v54
  %v118 = vunpack.c.l.b16 %v55
  %v119 = vunpack.c.l.b16 %v56
  %v120 = vunpack.c.l.b16 %v57
  %v121 = vunpack.c.l.b16 %v58
  %v122 = vunpack.c.l.b16 %v59
  %v123 = vunpack.c.l.b16 %v60
  %v124 = vpack.c.b16 %v97, %v96
  %v125 = vpack.c.b16 %v99, %v98
  %v126 = vpack.c.b16 %v101, %v100
  %v127 = vpack.c.b16 %v103, %v102
  %v128 = vpack.c.b16 %v105, %v104
  %v129 = vpack.c.b16 %v107, %v106
  %v130 = vpack.c.b16 %v109, %v108
  %v131 = vpack.c.b16 %v111, %v110
  %v132 = vpack.c.b16 %v113, %v112
  %v133 = vpack.c.b16 %v115, %v114
  %v134 = vpack.c.b16 %v117, %v116
  %v135 = vpack.c.b16 %v119, %v118
  %v136 = vpack.c.b16 %v121, %v120
  %v137 = vpack.c.b16 %v123, %v122
  %vm152 = vcmask 785408
  %v154 = vsel %vm152, %v32, 0
  %156 = vmatprep.subr.bf16.mxu0 0
  %157 = vmatpush1.bf16.msra.mxu0 %v124
  %158 = vmatprep.subr.bf16.mxu0 0
  %159 = vmatpush1.bf16.msra.mxu0 %v125
  %160 = vmatprep.subr.bf16.mxu0 0
  %161 = vmatpush1.bf16.msra.mxu0 %v126
  %162 = vmatprep.subr.bf16.mxu0 0
  %163 = vmatpush1.bf16.msra.mxu0 %v127
  %164 = vmatprep.subr.bf16.mxu0 0
  %165 = vmatpush1.bf16.msra.mxu0 %v128
  %166 = vmatprep.subr.bf16.mxu0 0
  %167 = vmatpush1.bf16.msra.mxu0 %v129
  %168 = vmatprep.subr.bf16.mxu0 0
  %169 = vmatpush1.bf16.msra.mxu0 %v130
  %170 = vmatprep.subr.bf16.mxu0 0
  %171 = vmatpush1.bf16.msra.mxu0 %v131
  %172 = vmatprep.subr.bf16.mxu0 0
  %173 = vmatpush1.bf16.msra.mxu0 %v132
  %174 = vmatprep.subr.bf16.mxu0 0
  %175 = vmatpush1.bf16.msra.mxu0 %v133
  %176 = vmatprep.subr.bf16.mxu0 0
  %177 = vmatpush1.bf16.msra.mxu0 %v134
  %178 = vmatprep.subr.bf16.mxu0 0
  %179 = vmatpush1.bf16.msra.mxu0 %v135
  %180 = vmatprep.subr.bf16.mxu0 0
  %181 = vmatpush1.bf16.msra.mxu0 %v136
  %182 = vmatprep.subr.bf16.mxu0 0
  %183 = vmatpush1.bf16.msra.mxu0 %v137
  %184 = vmatprep.subr.bf16.mxu0 0
  %185 = vmatpush1.bf16.msra.mxu0 0
  %186 = vmatprep.subr.bf16.mxu0 0
  %187 = vmatpush1.bf16.msra.mxu0 0
  %188 = vmatprep.mubr.bf16.mxu0 %v154
  %189 = vmatmul.mubr.bf16.gmra.mrb[0].mxu0 %v31
  %v190 = vpop.f32.mrb[0].mxu0
  %v191 = vadd.f32 %v66, %v190
  %v192 = vpop.f32.mrb[0].mxu0
  %v193 = vpop.f32.mrb[0].mxu0
  %v194 = vpop.f32.mrb[0].mxu0
  %195 = vdwg.mxu0
  %v196 = vmax.f32 %v191, 0.0
  %v197 = vpack.c.bf16 %v196, %v196
  %v198 = vld [vmem:[%s3] sm:$0xff]
  %v199 = vld [vmem:[%s3 + $0x8] sm:$0xff]
  %v200 = vld [vmem:[%s3 + $0x10] sm:$0xff]
  %v201 = vld [vmem:[%s4] sm:$0x3]
  %v203 = vlaneseq
  %v204 = vshrl.u32 %v203, 7
  %v205 = vsub.s32 0, %v204
  %v206 = vrot.slane %v201, %v205
  %v207 = vlaneseq
  %v208 = vshrl.u32 %v207, 7
  %v209 = vsub.s32 1, %v208
  %v210 = vrot.slane %v201, %v209
  %v216 = vunpack.c.l.b16 %v198
  %v217 = vunpack.c.h.b16 %v198
  %v218 = vunpack.c.l.b16 %v199
  %v219 = vunpack.c.h.b16 %v199
  %v220 = vunpack.c.l.b16 %v200
  %v221 = vunpack.c.h.b16 %v200
  %v222 = vpack.c.b16 %v218, %v216
  %v223 = vpack.c.b16 %v219, %v217
  %v224 = vpack.c.b16 %v220, %v220
  %v225 = vpack.c.b16 %v221, %v221
  %vm228 = vcmask 195584
  %v230 = vsel %vm228, %v197, 0
  %vm232 = vcmask 1043456
  %v234 = vsel %vm232, %v224, 0
  %v237 = vsel %vm232, %v225, 0
  %239 = vmatprep.subr.bf16.mxu0 %v223
  %240 = vmatpush1.bf16.msra.mxu0 %v222
  %241 = vmatprep.subr.bf16.mxu0 %v237
  %242 = vmatpush1.bf16.msra.mxu0 %v234
  %243 = vmatprep.subr.bf16.mxu0 0
  %244 = vmatpush1.bf16.msra.mxu0 0
  %245 = vmatprep.subr.bf16.mxu0 0
  %246 = vmatpush1.bf16.msra.mxu0 0
  %247 = vmatprep.subr.bf16.mxu0 0
  %248 = vmatpush1.bf16.msra.mxu0 0
  %249 = vmatprep.subr.bf16.mxu0 0
  %250 = vmatpush1.bf16.msra.mxu0 0
  %251 = vmatprep.subr.bf16.mxu0 0
  %252 = vmatpush1.bf16.msra.mxu0 0
  %253 = vmatprep.subr.bf16.mxu0 0
  %254 = vmatpush1.bf16.msra.mxu0 0
  %255 = vmatprep.subr.bf16.mxu0 0
  %256 = vmatpush1.bf16.msra.mxu0 0
  %257 = vmatprep.subr.bf16.mxu0 0
  %258 = vmatpush1.bf16.msra.mxu0 0
  %259 = vmatprep.subr.bf16.mxu0 0
  %260 = vmatpush1.bf16.msra.mxu0 0
  %261 = vmatprep.subr.bf16.mxu0 0
  %262 = vmatpush1.bf16.msra.mxu0 0
  %263 = vmatprep.subr.bf16.mxu0 0
  %264 = vmatpush1.bf16.msra.mxu0 0
  %265 = vmatprep.subr.bf16.mxu0 0
  %266 = vmatpush1.bf16.msra.mxu0 0
  %267 = vmatprep.subr.bf16.mxu0 0
  %268 = vmatpush1.bf16.msra.mxu0 0
  %269 = vmatprep.subr.bf16.mxu0 0
  %270 = vmatpush1.bf16.msra.mxu0 0
  %271 = vmatprep.mubr.bf16.mxu0 0
  %272 = vmatmul.mubr.bf16.gmra.mrb[0].mxu0 %v230
  %v273 = vpop.f32.mrb[0].mxu0
  %v274 = vadd.f32 %v206, %v273
  %v275 = vpop.f32.mrb[0].mxu0
  %v276 = vadd.f32 %v210, %v275
  %v277 = vpop.f32.mrb[0].mxu0
  %v278 = vpop.f32.mrb[0].mxu0
  %279 = vdwg.mxu0
  %v280 = vmax.f32 %v274, 0.0
  %v281 = vmax.f32 %v276, 0.0
  %v282 = vld [vmem:[%s5] sm:$0x3]
  %v284 = vlaneseq
  %v285 = vshrl.u32 %v284, 7
  %v286 = vsub.s32 0, %v285
  %v287 = vrot.slane %v282, %v286
  %v288 = vlaneseq
  %v289 = vshrl.u32 %v288, 7
  %v290 = vsub.s32 1, %v289
  %v291 = vrot.slane %v282, %v290
  %v294 = vmul.f32 %v280, %v287
  %v295 = vmul.f32 %v281, %v291
  %v296 = vsel %vm152, %v295, 0.0
  %v297 = vadd.f32 %v294, %v296
  %298 = vadd.xlane.f32.xlu0 %v297
  %v299 = vpop.xlane.xlu0 %298
  %v300 = vld [vmem:[#allocation2] sm:$0x1]
  %v302 = vlaneseq
  %v303 = vshrl.u32 %v302, 7
  %v304 = vsub.s32 0, %v303
  %v305 = vrot.slane %v300, %v304
  %v307 = vadd.f32 %v299, %v305
  %v308 = vmul.f32 %v307, 0.5
  %v309 = vtanh.pop %v308
  %v310 = vadd.f32 %v309, 1.0
  %v311 = vmul.f32 %v310, 0.5
  %vm312 = vcmask 7168
  %313 = vst.msk [vmem:[%s7] sm:$0xff] %vm312, %v311
  // Predicated region
  $region30: #{tpu_custom_call.1} parent=0 // pred_check
    _
  $region31: #{tpu_custom_call.1} parent=0 // pred_check_branch
    %315 = sbr.rel (0) target = $region33
  $region32: #{tpu_custom_call.1} parent=0 // pred_region
    _
  $region33: #{tpu_custom_call.1} parent=0 // pred_fallthru
    _
  // Predicated region
  $region34: #{tpu_custom_call.1} parent=0 // pred_check
    _
  $region35: #{tpu_custom_call.1} parent=0 // pred_check_branch
    %317 = sbr.rel (0) target = $region37
  $region36: #{tpu_custom_call.1} parent=0 // pred_region
    _
  $region37: #{tpu_custom_call.1} parent=0 // pred_fallthru
    _

</llo_original>
